<compile_context>
chip_gen: v5e
topology: v5e:2x2
jax: 0.10.0
libtpu: 0.0.40
codegen_flags: <defaults>
</compile_context>

<pallas_src>
import jax
import jax.numpy as jnp
from jax.experimental import pallas as pl
from jax.experimental.pallas import tpu as pltpu


def _round_up(x, m):
    return ((x + m - 1) // m) * m


def ps_kernel(u_e_ref, i_e_ref, beta_ref, w_ref, r_mask_ref, out_ref):
    # u_e:    (TB, D)      f32
    # i_e:    (TB, D, LP)  f32   (D on sublanes, L lane-dense)
    # beta:   (TB, LP)     f32
    # w:      (1, LP)      f32   (VMEM-resident across all grid steps)
    # r_mask: (TB, LP)     f32
    # out:    (TB, LP)     f32
    u_e = u_e_ref[...]                                   # (TB, D)
    i_e = i_e_ref[...]                                   # (TB, D, LP)
    # emb_sim[b, l] = sum_d u_e[b, d] * i_e[b, d, l]
    #   -> lane-broadcast of u_e, sublane-axis reduce, lane-dense result on L.
    emb_sim = jnp.sum(u_e[:, :, None] * i_e, axis=1)     # (TB, LP)
    w_mul = beta_ref[...] * w_ref[...]                   # (1,LP) broadcasts
    out_ref[...] = (w_mul + emb_sim) * r_mask_ref[...]


def ps_forward(u, r, r_mask, s, beta, user_emb, item_emb, w):
    """JAX wrapper reproducing P_S_Network.forward.

    u:      (B, 1)  int32   user indices
    r:      (B, L)  int32   item indices
    r_mask: (B, L)  int32   padding mask
    s:      (B, L)  int32   (unused in forward, kept for API parity)
    beta:   (B, L)  float32 exogenous variable
    """
    del s  # unused by the reference forward pass
    B, L = r.shape
    D = user_emb.shape[1]

    # Glue: embedding lookups (data-dependent gather) + parameter slice.
    # TODO(synk): fuse the item-embedding gather into the kernel (item_emb in
    # pl.ANY + r via scalar prefetch + manual make_async_copy row gathers) to
    # remove the extra HBM pass over i_e; kernel is HBM-bandwidth bound.
    u_e = jnp.take(user_emb, u[:, 0], axis=0)             # (B, D)
    i_e = jnp.take(item_emb, r, axis=0)                   # (B, L, D)
    i_e = jnp.transpose(i_e, (0, 2, 1))                   # (B, D, L)

    beta_f = beta.astype(jnp.float32)
    mask_f = r_mask.astype(jnp.float32)
    w_slice = w[:, :L].astype(jnp.float32)                # (1, L)

    # Lane-dense layout: pad L up to a multiple of 128 (unmasked stores,
    # satisfies the (8,128) BlockSpec rule), pad B up to the batch tile.
    LP = _round_up(max(L, 128), 128)
    # Keep the double-buffered i_e tile around ~8 MiB so it fits every
    # generation's default scoped VMEM (16 MiB on v5e, 32 MiB v6e/v7x).
    tb_cap = max(8, (8 * 1024 * 1024) // (2 * 4 * D * LP))
    tb_cap = max(8, (tb_cap // 8) * 8)
    TB = min(_round_up(B, 8), tb_cap, 512)
    BP = _round_up(B, TB)

    u_e_p = jnp.pad(u_e, ((0, BP - B), (0, 0)))
    i_e_p = jnp.pad(i_e, ((0, BP - B), (0, 0), (0, LP - L)))
    beta_p = jnp.pad(beta_f, ((0, BP - B), (0, LP - L)))
    mask_p = jnp.pad(mask_f, ((0, BP - B), (0, LP - L)))
    w_p = jnp.pad(w_slice, ((0, 0), (0, LP - L)))

    grid = (BP // TB,)

    cost = pl.CostEstimate(
        flops=2 * B * L * D + 3 * B * L,
        transcendentals=0,
        bytes_accessed=4 * (BP * D * LP + BP * D + 3 * BP * LP + LP),
    )

    out_p = pl.pallas_call(
        ps_kernel,
        out_shape=jax.ShapeDtypeStruct((BP, LP), jnp.float32),
        grid_spec=pltpu.PrefetchScalarGridSpec(
            num_scalar_prefetch=0,
            grid=grid,
            in_specs=[
                pl.BlockSpec((TB, D), lambda i: (i, 0)),        # u_e
                pl.BlockSpec((TB, D, LP), lambda i: (i, 0, 0)),  # i_e
                pl.BlockSpec((TB, LP), lambda i: (i, 0)),        # beta
                pl.BlockSpec((1, LP), lambda i: (0, 0)),         # w (resident)
                pl.BlockSpec((TB, LP), lambda i: (i, 0)),        # r_mask
            ],
            out_specs=pl.BlockSpec((TB, LP), lambda i: (i, 0)),
        ),
        compiler_params=pltpu.CompilerParams(
            dimension_semantics=("parallel",),
            vmem_limit_bytes=32 * 1024 * 1024,
        ),
        cost_estimate=cost,
    )(u_e_p, i_e_p, beta_p, w_p, mask_p)

    return out_p[:B, :L]


def init_params(key, n_users, n_items, K, emb_dim=32):
    k1, k2, k3 = jax.random.split(key, 3)
    user_emb = jax.random.normal(k1, (n_users, emb_dim), jnp.float32)
    item_emb = jax.random.normal(k2, (n_items, emb_dim), jnp.float32)
    # padding_idx=0 -> embedding row 0 is zero
    user_emb = user_emb.at[0].set(0.0)
    item_emb = item_emb.at[0].set(0.0)
    w = jax.random.normal(k3, (1, K), jnp.float32)        # nn.Parameter(randn(1, K))
    return user_emb, item_emb, w


def reference_forward(u, r, r_mask, beta, user_emb, item_emb, w):
    """Pure-JAX reference for correctness checking."""
    L = r.shape[1]
    u_e = jnp.take(user_emb, u[:, 0], axis=0)             # (B, D)
    i_e = jnp.take(item_emb, r, axis=0)                   # (B, L, D)
    emb_sim = jnp.einsum("bd,bld->bl", u_e, i_e)
    w_mul = beta.astype(jnp.float32) * w[:, :L]
    return (w_mul + emb_sim) * r_mask.astype(jnp.float32)


if __name__ == "__main__":
    # Small, module-consistent shapes.
    n_users, n_items, K, emb_dim = 10, 20, 8, 32
    batch, max_len = 2, 8

    key = jax.random.PRNGKey(0)
    kp, ku, kr, km, ks, kb = jax.random.split(key, 6)

    user_emb, item_emb, w = init_params(kp, n_users, n_items, K, emb_dim)

    u = jax.random.randint(ku, (batch, 1), 1, n_users, dtype=jnp.int32)
    r = jax.random.randint(kr, (batch, max_len), 0, n_items, dtype=jnp.int32)
    r_mask = (r != 0).astype(jnp.int32)
    s = jax.random.randint(ks, (batch, max_len), 0, 2, dtype=jnp.int32)
    beta = jax.random.normal(kb, (batch, max_len), jnp.float32)

    out = ps_forward(u, r, r_mask, s, beta, user_emb, item_emb, w)
    out = jax.block_until_ready(out)

    ref = reference_forward(u, r, r_mask, beta, user_emb, item_emb, w)
    assert out.shape == (batch, max_len)
    assert jnp.allclose(out, ref, atol=1e-5, rtol=1e-5), "mismatch vs reference"

    print("KERNEL_OK")
</pallas_src>

<mosaic_0001>
module attributes {stable_mosaic.version = 11 : i64} {
  func.func @ps_kernel(%arg0: i32, %arg1: memref<8x32xf32, #tpu.memory_space<vmem>>, %arg2: memref<8x32x128xf32, #tpu.memory_space<vmem>>, %arg3: memref<8x128xf32, #tpu.memory_space<vmem>>, %arg4: memref<1x128xf32, #tpu.memory_space<vmem>>, %arg5: memref<8x128xf32, #tpu.memory_space<vmem>>, %arg6: memref<8x128xf32, #tpu.memory_space<vmem>>) attributes {dimension_semantics = [#tpu.dimension_semantics<parallel>], iteration_bounds = array<i64: 1>, scalar_prefetch = 0 : i64, scratch_operands = 0 : i64, tpu.core_type = #tpu.core_type<tc>, window_params = [{transform_indices = @transform_0, window_bounds = array<i64: 8, 32>}, {transform_indices = @transform_1, window_bounds = array<i64: 8, 32, 128>}, {transform_indices = @transform_2, window_bounds = array<i64: 8, 128>}, {pipeline_mode = #tpu.pipeline_mode<synchronous>, transform_indices = @transform_3, window_bounds = array<i64: 1, 128>}, {transform_indices = @transform_4, window_bounds = array<i64: 8, 128>}, {transform_indices = @transform_5, window_bounds = array<i64: 8, 128>}]} {
    %c0 = arith.constant 0 : index
    %c0_0 = arith.constant 0 : index
    %0 = vector.load %arg1[%c0, %c0_0] : memref<8x32xf32, #tpu.memory_space<vmem>>, vector<8x32xf32>
    %c0_1 = arith.constant 0 : index
    %c0_2 = arith.constant 0 : index
    %c0_3 = arith.constant 0 : index
    %1 = vector.load %arg2[%c0_1, %c0_2, %c0_3] : memref<8x32x128xf32, #tpu.memory_space<vmem>>, vector<8x32x128xf32>
    %2 = vector.shape_cast %0 : vector<8x32xf32> to vector<8x32x1xf32>
    %3 = vector.broadcast %2 : vector<8x32x1xf32> to vector<8x32x128xf32>
    %4 = arith.mulf %3, %1 : vector<8x32x128xf32>
    %cst = arith.constant dense<0.000000e+00> : vector<8x128xf32>
    %5 = vector.multi_reduction <add>, %4, %cst [1] : vector<8x32x128xf32> to vector<8x128xf32>
    %c0_4 = arith.constant 0 : index
    %c0_5 = arith.constant 0 : index
    %6 = vector.load %arg3[%c0_4, %c0_5] : memref<8x128xf32, #tpu.memory_space<vmem>>, vector<8x128xf32>
    %c0_6 = arith.constant 0 : index
    %c0_7 = arith.constant 0 : index
    %7 = vector.load %arg4[%c0_6, %c0_7] : memref<1x128xf32, #tpu.memory_space<vmem>>, vector<1x128xf32>
    %8 = vector.broadcast %7 : vector<1x128xf32> to vector<8x128xf32>
    %9 = arith.mulf %6, %8 : vector<8x128xf32>
    %10 = arith.addf %9, %5 : vector<8x128xf32>
    %c0_8 = arith.constant 0 : index
    %c0_9 = arith.constant 0 : index
    %11 = vector.load %arg5[%c0_8, %c0_9] : memref<8x128xf32, #tpu.memory_space<vmem>>, vector<8x128xf32>
    %12 = arith.mulf %10, %11 : vector<8x128xf32>
    %c0_10 = arith.constant 0 : index
    %c0_11 = arith.constant 0 : index
    %13 = vector.load %arg6[%c0_10, %c0_11] : memref<8x128xf32, #tpu.memory_space<vmem>>, vector<8x128xf32>
    tpu.vector_store %arg6[%c0_10, %c0_11], %12 {strides = array<i32>} : memref<8x128xf32, #tpu.memory_space<vmem>>, vector<8x128xf32>,
    return
  }
  func.func @transform_0(%arg0: i32) -> (i32, i32) {
    %c0_i32 = arith.constant 0 : i32
    %c0_i32_0 = arith.constant 0 : i32
    return %arg0, %c0_i32 : i32, i32
  }
  func.func @transform_1(%arg0: i32) -> (i32, i32, i32) {
    %c0_i32 = arith.constant 0 : i32
    %c0_i32_0 = arith.constant 0 : i32
    %c0_i32_1 = arith.constant 0 : i32
    return %arg0, %c0_i32, %c0_i32_0 : i32, i32, i32
  }
  func.func @transform_2(%arg0: i32) -> (i32, i32) {
    %c0_i32 = arith.constant 0 : i32
    %c0_i32_0 = arith.constant 0 : i32
    return %arg0, %c0_i32 : i32, i32
  }
  func.func @transform_3(%arg0: i32) -> (i32, i32) {
    %c0_i32 = arith.constant 0 : i32
    %c0_i32_0 = arith.constant 0 : i32
    %c0_i32_1 = arith.constant 0 : i32
    return %c0_i32, %c0_i32_0 : i32, i32
  }
  func.func @transform_4(%arg0: i32) -> (i32, i32) {
    %c0_i32 = arith.constant 0 : i32
    %c0_i32_0 = arith.constant 0 : i32
    return %arg0, %c0_i32 : i32, i32
  }
  func.func @transform_5(%arg0: i32) -> (i32, i32) {
    %c0_i32 = arith.constant 0 : i32
    %c0_i32_0 = arith.constant 0 : i32
    return %arg0, %c0_i32 : i32, i32
  }
}

</mosaic_0001>

<llo_original>
// kernel: tpu_custom_call.1
$region0: #{tpu_custom_call.1}
  #allocation0 [shape = 'u32[]', space=smem, size = 0x4, offset = 0x4, fixed_abs, tag = 'smem constant byte address 0x4 - core index']
  #allocation1 [shape = 'u32[72,128]{1,0:T(1,128)}', space=vmem, size = 0x9000, scoped, tag = 'internal scratch']
  %s0 = inlined_call_operand.hbm [shape: f32[8,32], index: 0, kind: input, shape index: {}]
  %s1 = inlined_call_operand.hbm [shape: f32[8,32,128], index: 1, kind: input, shape index: {}]
  %s2 = inlined_call_operand.hbm [shape: f32[8,128], index: 2, kind: input, shape index: {}]
  %s3 = inlined_call_operand.vmem [shape: f32[1,128], index: 3, kind: input, shape index: {}]
  %s4 = inlined_call_operand.hbm [shape: f32[8,128], index: 4, kind: input, shape index: {}]
  %s5 = inlined_call_operand.hbm [shape: f32[8,128], index: 5, kind: output, shape index: {}]
  %s6 = sld [smem:[#allocation0]]
  $region46: #{tpu_custom_call.1} parent=0
    _
  %s8 = ssub.s32 1, %s6
  %s9 = scalar_select 0, %s8, %s6
  $region1: #{tpu_custom_call.1} parent=0
    #allocation2 [shape = 'u8[4096]{0}', space=vmem, size = 0x1000, scoped, tag = 'input window, operand 0, single buffered']
    #allocation3 [shape = 's32[1]{0}', space=sflag, size = 0x4, scoped, tag = 'scoped memory for tpu_custom_call.1']
    #allocation4 [shape = 's32[1]{0}', space=sflag, size = 0x4, scoped, tag = 'scoped memory for tpu_custom_call.1']
    #allocation5 [shape = 'u8[131072]{0}', space=vmem, size = 0x20000, scoped, tag = 'input window, operand 1, single buffered']
    #allocation6 [shape = 's32[1]{0}', space=sflag, size = 0x4, scoped, tag = 'scoped memory for tpu_custom_call.1']
    #allocation7 [shape = 'u8[4096]{0}', space=vmem, size = 0x1000, scoped, tag = 'input window, operand 2, single buffered']
    #allocation8 [shape = 'u8[4096]{0}', space=vmem, size = 0x1000, scoped, tag = 'input window, operand 4, single buffered']
    #allocation9 [shape = 's32[1]{0}', space=sflag, size = 0x4, scoped, tag = 'scoped memory for tpu_custom_call.1']
    #allocation10 [shape = 'u8[4096]{0}', space=vmem, size = 0x1000, scoped, tag = 'output window, operand 0, single buffered']
    %10 = vsyncpa [#allocation3], 0
    %11 = vsyncpa [#allocation6], 0
    %12 = vsyncpa [#allocation9], 0
    %13 = vsyncpa [#allocation4], 0
    // Predicated region
    $region2: #{tpu_custom_call.1} parent=1 // pred_check
      _
    $region3: #{tpu_custom_call.1} parent=1 // pred_check_branch
      %15 = sbr.rel (0) target = $region5
    $region4: #{tpu_custom_call.1} parent=1 // pred_region
      %17 = vsyncadd [#allocation3], 0
      %s19 = sshll.u32 %s0, 4
      %s20 = int_to_ptr.hbm [resolvable:$true] %s19
      %s21 = sshll.u32 [#allocation2], 4
      %s22 = int_to_ptr.vmem [resolvable:$true] %s21
      %24 = dma.hbm_to_vmem [thread:$0]  %s20, 128, %s22, [#allocation3]
    $region5: #{tpu_custom_call.1} parent=1 // pred_fallthru
      _
    // Predicated region
    $region6: #{tpu_custom_call.1} parent=1 // pred_check
      _
    $region7: #{tpu_custom_call.1} parent=1 // pred_check_branch
      %26 = sbr.rel (0) target = $region9
    $region8: #{tpu_custom_call.1} parent=1 // pred_region
      %28 = vsyncadd [#allocation6], 0
      %s29 = sshll.u32 %s1, 4
      %s30 = int_to_ptr.hbm [resolvable:$true] %s29
      %s31 = sshll.u32 [#allocation5], 4
      %s32 = int_to_ptr.vmem [resolvable:$true] %s31
      %37 = dma.hbm_to_vmem [thread:$0]  %s30, 4096, %s32, [#allocation6], 128, 128, 8
    $region9: #{tpu_custom_call.1} parent=1 // pred_fallthru
      _
    // Predicated region
    $region10: #{tpu_custom_call.1} parent=1 // pred_check
      _
    $region11: #{tpu_custom_call.1} parent=1 // pred_check_branch
      %39 = sbr.rel (0) target = $region13
    $region12: #{tpu_custom_call.1} parent=1 // pred_region
      %41 = vsyncadd [#allocation6], 0
      %s43 = sshll.u32 %s2, 4
      %s44 = int_to_ptr.hbm [resolvable:$true] %s43
      %s45 = sshll.u32 [#allocation7], 4
      %s46 = int_to_ptr.vmem [resolvable:$true] %s45
      %48 = dma.hbm_to_vmem [thread:$0]  %s44, 128, %s46, [#allocation6]
    $region13: #{tpu_custom_call.1} parent=1 // pred_fallthru
      _
    // Predicated region
    $region14: #{tpu_custom_call.1} parent=1 // pred_check
      _
    $region15: #{tpu_custom_call.1} parent=1 // pred_check_branch
      %50 = sbr.rel (0) target = $region17
    $region16: #{tpu_custom_call.1} parent=1 // pred_region
      _
    $region17: #{tpu_custom_call.1} parent=1 // pred_fallthru
      _
    // Predicated region
    $region18: #{tpu_custom_call.1} parent=1 // pred_check
      _
    $region19: #{tpu_custom_call.1} parent=1 // pred_check_branch
      %52 = sbr.rel (0) target = $region21
    $region20: #{tpu_custom_call.1} parent=1 // pred_region
      %54 = vsyncadd [#allocation9], 0
      %s56 = sshll.u32 %s4, 4
      %s57 = int_to_ptr.hbm [resolvable:$true] %s56
      %s58 = sshll.u32 [#allocation8], 4
      %s59 = int_to_ptr.vmem [resolvable:$true] %s58
      %61 = dma.hbm_to_vmem [thread:$0]  %s57, 128, %s59, [#allocation9]
    $region21: #{tpu_custom_call.1} parent=1 // pred_fallthru
      _
    // Predicated region
    $region22: #{tpu_custom_call.1} parent=1 // pred_check
      _
    $region23: #{tpu_custom_call.1} parent=1 // pred_check_branch
      %63 = sbr.rel (0) target = $region25
    $region24: #{tpu_custom_call.1} parent=1 // pred_region
      %65 = dma.done [#allocation3], 128
    $region25: #{tpu_custom_call.1} parent=1 // pred_fallthru
      _
    // Predicated region
    $region26: #{tpu_custom_call.1} parent=1 // pred_check
      _
    $region27: #{tpu_custom_call.1} parent=1 // pred_check_branch
      %67 = sbr.rel (0) target = $region29
    $region28: #{tpu_custom_call.1} parent=1 // pred_region
      %69 = dma.done [#allocation6], 4096
    $region29: #{tpu_custom_call.1} parent=1 // pred_fallthru
      _
    // Predicated region
    $region30: #{tpu_custom_call.1} parent=1 // pred_check
      _
    $region31: #{tpu_custom_call.1} parent=1 // pred_check_branch
      %71 = sbr.rel (0) target = $region33
    $region32: #{tpu_custom_call.1} parent=1 // pred_region
      %73 = dma.done [#allocation6], 128
    $region33: #{tpu_custom_call.1} parent=1 // pred_fallthru
      _
    // Predicated region
    $region34: #{tpu_custom_call.1} parent=1 // pred_check
      _
    $region35: #{tpu_custom_call.1} parent=1 // pred_check_branch
      %75 = sbr.rel (0) target = $region37
    $region36: #{tpu_custom_call.1} parent=1 // pred_region
      %77 = dma.done [#allocation9], 128
    $region37: #{tpu_custom_call.1} parent=1 // pred_fallthru
      _
    %v78 = vld [vmem:[#allocation2] sm:$0xff]
    %v79 = vld [vmem:[#allocation5] sm:$0xff]
    %v80 = vld [vmem:[#allocation5 + $0x8] sm:$0xff]
    %v81 = vld [vmem:[#allocation5 + $0x10] sm:$0xff]
    %v82 = vld [vmem:[#allocation5 + $0x18] sm:$0xff]
    %v83 = vld [vmem:[#allocation5 + $0x20] sm:$0xff]
    %v84 = vld [vmem:[#allocation5 + $0x28] sm:$0xff]
    %v85 = vld [vmem:[#allocation5 + $0x30] sm:$0xff]
    %v86 = vld [vmem:[#allocation5 + $0x38] sm:$0xff]
    %v87 = vld [vmem:[#allocation5 + $0x40] sm:$0xff]
    %v88 = vld [vmem:[#allocation5 + $0x48] sm:$0xff]
    %v89 = vld [vmem:[#allocation5 + $0x50] sm:$0xff]
    %v90 = vld [vmem:[#allocation5 + $0x58] sm:$0xff]
    %v91 = vld [vmem:[#allocation5 + $0x60] sm:$0xff]
    %v92 = vld [vmem:[#allocation5 + $0x68] sm:$0xff]
    %v93 = vld [vmem:[#allocation5 + $0x70] sm:$0xff]
    %v94 = vld [vmem:[#allocation5 + $0x78] sm:$0xff]
    %v95 = vld [vmem:[#allocation5 + $0x80] sm:$0xff]
    %v96 = vld [vmem:[#allocation5 + $0x88] sm:$0xff]
    %v97 = vld [vmem:[#allocation5 + $0x90] sm:$0xff]
    %v98 = vld [vmem:[#allocation5 + $0x98] sm:$0xff]
    %v99 = vld [vmem:[#allocation5 + $0xa0] sm:$0xff]
    %v100 = vld [vmem:[#allocation5 + $0xa8] sm:$0xff]
    %v101 = vld [vmem:[#allocation5 + $0xb0] sm:$0xff]
    %v102 = vld [vmem:[#allocation5 + $0xb8] sm:$0xff]
    %v103 = vld [vmem:[#allocation5 + $0xc0] sm:$0xff]
    %v104 = vld [vmem:[#allocation5 + $0xc8] sm:$0xff]
    %v105 = vld [vmem:[#allocation5 + $0xd0] sm:$0xff]
    %v106 = vld [vmem:[#allocation5 + $0xd8] sm:$0xff]
    %v107 = vld [vmem:[#allocation5 + $0xe0] sm:$0xff]
    %v108 = vld [vmem:[#allocation5 + $0xe8] sm:$0xff]
    %v109 = vld [vmem:[#allocation5 + $0xf0] sm:$0xff]
    %v110 = vld [vmem:[#allocation5 + $0xf8] sm:$0xff]
    %v111 = vperm.slane %v78, 0
    %v112 = vlaneseq
    %v113 = vshrl.u32 %v112, 7
    %115 = vset.pattern.permute.xlu0 %v113
    %116 = vperm.xlu0 %115, %v111
    %v117 = vpop.permute.xlu0 %116
    %v118 = vlaneseq
    %v119 = vshrl.u32 %v118, 7
    %v120 = vadd.s32 %v119, 8
    %121 = vset.pattern.permute.xlu0 %v120
    %122 = vperm.xlu0 %121, %v111
    %v123 = vpop.permute.xlu0 %122
    %v124 = vlaneseq
    %v125 = vshrl.u32 %v124, 7
    %v126 = vadd.s32 %v125, 16
    %127 = vset.pattern.permute.xlu0 %v126
    %128 = vperm.xlu0 %127, %v111
    %v129 = vpop.permute.xlu0 %128
    %v130 = vlaneseq
    %v131 = vshrl.u32 %v130, 7
    %v132 = vadd.s32 %v131, 24
    %133 = vset.pattern.permute.xlu0 %v132
    %134 = vperm.xlu0 %133, %v111
    %v135 = vpop.permute.xlu0 %134
    %v136 = vperm.slane %v78, 1
    %v137 = vlaneseq
    %v138 = vshrl.u32 %v137, 7
    %140 = vset.pattern.permute.xlu0 %v138
    %141 = vperm.xlu0 %140, %v136
    %v142 = vpop.permute.xlu0 %141
    %v143 = vlaneseq
    %v144 = vshrl.u32 %v143, 7
    %v145 = vadd.s32 %v144, 8
    %146 = vset.pattern.permute.xlu0 %v145
    %147 = vperm.xlu0 %146, %v136
    %v148 = vpop.permute.xlu0 %147
    %v149 = vlaneseq
    %v150 = vshrl.u32 %v149, 7
    %v151 = vadd.s32 %v150, 16
    %152 = vset.pattern.permute.xlu0 %v151
    %153 = vperm.xlu0 %152, %v136
    %v154 = vpop.permute.xlu0 %153
    %v155 = vlaneseq
    %v156 = vshrl.u32 %v155, 7
    %v157 = vadd.s32 %v156, 24
    %158 = vset.pattern.permute.xlu0 %v157
    %159 = vperm.xlu0 %158, %v136
    %v160 = vpop.permute.xlu0 %159
    %v161 = vperm.slane %v78, 2
    %v162 = vlaneseq
    %v163 = vshrl.u32 %v162, 7
    %165 = vset.pattern.permute.xlu0 %v163
    %166 = vperm.xlu0 %165, %v161
    %v167 = vpop.permute.xlu0 %166
    %v168 = vlaneseq
    %v169 = vshrl.u32 %v168, 7
    %v170 = vadd.s32 %v169, 8
    %171 = vset.pattern.permute.xlu0 %v170
    %172 = vperm.xlu0 %171, %v161
    %v173 = vpop.permute.xlu0 %172
    %v174 = vlaneseq
    %v175 = vshrl.u32 %v174, 7
    %v176 = vadd.s32 %v175, 16
    %177 = vset.pattern.permute.xlu0 %v176
    %178 = vperm.xlu0 %177, %v161
    %v179 = vpop.permute.xlu0 %178
    %v180 = vlaneseq
    %v181 = vshrl.u32 %v180, 7
    %v182 = vadd.s32 %v181, 24
    %183 = vset.pattern.permute.xlu0 %v182
    %184 = vperm.xlu0 %183, %v161
    %v185 = vpop.permute.xlu0 %184
    %v186 = vperm.slane %v78, 3
    %v187 = vlaneseq
    %v188 = vshrl.u32 %v187, 7
    %190 = vset.pattern.permute.xlu0 %v188
    %191 = vperm.xlu0 %190, %v186
    %v192 = vpop.permute.xlu0 %191
    %v193 = vlaneseq
    %v194 = vshrl.u32 %v193, 7
    %v195 = vadd.s32 %v194, 8
    %196 = vset.pattern.permute.xlu0 %v195
    %197 = vperm.xlu0 %196, %v186
    %v198 = vpop.permute.xlu0 %197
    %v199 = vlaneseq
    %v200 = vshrl.u32 %v199, 7
    %v201 = vadd.s32 %v200, 16
    %202 = vset.pattern.permute.xlu0 %v201
    %203 = vperm.xlu0 %202, %v186
    %v204 = vpop.permute.xlu0 %203
    %v205 = vlaneseq
    %v206 = vshrl.u32 %v205, 7
    %v207 = vadd.s32 %v206, 24
    %208 = vset.pattern.permute.xlu0 %v207
    %209 = vperm.xlu0 %208, %v186
    %v210 = vpop.permute.xlu0 %209
    %v211 = vperm.slane %v78, 4
    %v212 = vlaneseq
    %v213 = vshrl.u32 %v212, 7
    %215 = vset.pattern.permute.xlu0 %v213
    %216 = vperm.xlu0 %215, %v211
    %v217 = vpop.permute.xlu0 %216
    %v218 = vlaneseq
    %v219 = vshrl.u32 %v218, 7
    %v220 = vadd.s32 %v219, 8
    %221 = vset.pattern.permute.xlu0 %v220
    %222 = vperm.xlu0 %221, %v211
    %v223 = vpop.permute.xlu0 %222
    %v224 = vlaneseq
    %v225 = vshrl.u32 %v224, 7
    %v226 = vadd.s32 %v225, 16
    %227 = vset.pattern.permute.xlu0 %v226
    %228 = vperm.xlu0 %227, %v211
    %v229 = vpop.permute.xlu0 %228
    %v230 = vlaneseq
    %v231 = vshrl.u32 %v230, 7
    %v232 = vadd.s32 %v231, 24
    %233 = vset.pattern.permute.xlu0 %v232
    %234 = vperm.xlu0 %233, %v211
    %v235 = vpop.permute.xlu0 %234
    %v236 = vperm.slane %v78, 5
    %v237 = vlaneseq
    %v238 = vshrl.u32 %v237, 7
    %240 = vset.pattern.permute.xlu0 %v238
    %241 = vperm.xlu0 %240, %v236
    %v242 = vpop.permute.xlu0 %241
    %v243 = vlaneseq
    %v244 = vshrl.u32 %v243, 7
    %v245 = vadd.s32 %v244, 8
    %246 = vset.pattern.permute.xlu0 %v245
    %247 = vperm.xlu0 %246, %v236
    %v248 = vpop.permute.xlu0 %247
    %v249 = vlaneseq
    %v250 = vshrl.u32 %v249, 7
    %v251 = vadd.s32 %v250, 16
    %252 = vset.pattern.permute.xlu0 %v251
    %253 = vperm.xlu0 %252, %v236
    %v254 = vpop.permute.xlu0 %253
    %v255 = vlaneseq
    %v256 = vshrl.u32 %v255, 7
    %v257 = vadd.s32 %v256, 24
    %258 = vset.pattern.permute.xlu0 %v257
    %259 = vperm.xlu0 %258, %v236
    %v260 = vpop.permute.xlu0 %259
    %v261 = vperm.slane %v78, 6
    %v262 = vlaneseq
    %v263 = vshrl.u32 %v262, 7
    %265 = vset.pattern.permute.xlu0 %v263
    %266 = vperm.xlu0 %265, %v261
    %v267 = vpop.permute.xlu0 %266
    %v268 = vlaneseq
    %v269 = vshrl.u32 %v268, 7
    %v270 = vadd.s32 %v269, 8
    %271 = vset.pattern.permute.xlu0 %v270
    %272 = vperm.xlu0 %271, %v261
    %v273 = vpop.permute.xlu0 %272
    %v274 = vlaneseq
    %v275 = vshrl.u32 %v274, 7
    %v276 = vadd.s32 %v275, 16
    %277 = vset.pattern.permute.xlu0 %v276
    %278 = vperm.xlu0 %277, %v261
    %v279 = vpop.permute.xlu0 %278
    %v280 = vlaneseq
    %v281 = vshrl.u32 %v280, 7
    %v282 = vadd.s32 %v281, 24
    %283 = vset.pattern.permute.xlu0 %v282
    %284 = vperm.xlu0 %283, %v261
    %v285 = vpop.permute.xlu0 %284
    %v286 = vperm.slane %v78, 7
    %v287 = vlaneseq
    %v288 = vshrl.u32 %v287, 7
    %290 = vset.pattern.permute.xlu0 %v288
    %291 = vperm.xlu0 %290, %v286
    %v292 = vpop.permute.xlu0 %291
    %v293 = vlaneseq
    %v294 = vshrl.u32 %v293, 7
    %v295 = vadd.s32 %v294, 8
    %296 = vset.pattern.permute.xlu0 %v295
    %297 = vperm.xlu0 %296, %v286
    %v298 = vpop.permute.xlu0 %297
    %v299 = vlaneseq
    %v300 = vshrl.u32 %v299, 7
    %v301 = vadd.s32 %v300, 16
    %302 = vset.pattern.permute.xlu0 %v301
    %303 = vperm.xlu0 %302, %v286
    %v304 = vpop.permute.xlu0 %303
    %v305 = vlaneseq
    %v306 = vshrl.u32 %v305, 7
    %v307 = vadd.s32 %v306, 24
    %308 = vset.pattern.permute.xlu0 %v307
    %309 = vperm.xlu0 %308, %v286
    %v310 = vpop.permute.xlu0 %309
    %v311 = vmul.f32 %v117, %v79
    %v312 = vmul.f32 %v123, %v80
    %v313 = vmul.f32 %v129, %v81
    %v314 = vmul.f32 %v135, %v82
    %v315 = vmul.f32 %v142, %v83
    %v316 = vmul.f32 %v148, %v84
    %v317 = vmul.f32 %v154, %v85
    %v318 = vmul.f32 %v160, %v86
    %v319 = vmul.f32 %v167, %v87
    %v320 = vmul.f32 %v173, %v88
    %v321 = vmul.f32 %v179, %v89
    %v322 = vmul.f32 %v185, %v90
    %v323 = vmul.f32 %v192, %v91
    %v324 = vmul.f32 %v198, %v92
    %v325 = vmul.f32 %v204, %v93
    %v326 = vmul.f32 %v210, %v94
    %v327 = vmul.f32 %v217, %v95
    %v328 = vmul.f32 %v223, %v96
    %v329 = vmul.f32 %v229, %v97
    %v330 = vmul.f32 %v235, %v98
    %v331 = vmul.f32 %v242, %v99
    %v332 = vmul.f32 %v248, %v100
    %v333 = vmul.f32 %v254, %v101
    %v334 = vmul.f32 %v260, %v102
    %v335 = vmul.f32 %v267, %v103
    %v336 = vmul.f32 %v273, %v104
    %v337 = vmul.f32 %v279, %v105
    %v338 = vmul.f32 %v285, %v106
    %v339 = vmul.f32 %v292, %v107
    %v340 = vmul.f32 %v298, %v108
    %v341 = vmul.f32 %v304, %v109
    %v342 = vmul.f32 %v310, %v110
    %v343 = vadd.f32 %v311, %v312
    %v344 = vadd.f32 %v343, %v313
    %v345 = vadd.f32 %v344, %v314
    %v346 = vrot.slane %v345, 4
    %v347 = vadd.f32 %v345, %v346
    %v348 = vrot.slane %v347, 2
    %v349 = vadd.f32 %v347, %v348
    %v350 = vrot.slane %v349, 1
    %v351 = vadd.f32 %v349, %v350
    %v352 = vadd.f32 %v315, %v316
    %v353 = vadd.f32 %v352, %v317
    %v354 = vadd.f32 %v353, %v318
    %v355 = vrot.slane %v354, 4
    %v356 = vadd.f32 %v354, %v355
    %v357 = vrot.slane %v356, 2
    %v358 = vadd.f32 %v356, %v357
    %v359 = vrot.slane %v358, 1
    %v360 = vadd.f32 %v358, %v359
    %v361 = vadd.f32 %v319, %v320
    %v362 = vadd.f32 %v361, %v321
    %v363 = vadd.f32 %v362, %v322
    %v364 = vrot.slane %v363, 4
    %v365 = vadd.f32 %v363, %v364
    %v366 = vrot.slane %v365, 2
    %v367 = vadd.f32 %v365, %v366
    %v368 = vrot.slane %v367, 1
    %v369 = vadd.f32 %v367, %v368
    %v370 = vadd.f32 %v323, %v324
    %v371 = vadd.f32 %v370, %v325
    %v372 = vadd.f32 %v371, %v326
    %v373 = vrot.slane %v372, 4
    %v374 = vadd.f32 %v372, %v373
    %v375 = vrot.slane %v374, 2
    %v376 = vadd.f32 %v374, %v375
    %v377 = vrot.slane %v376, 1
    %v378 = vadd.f32 %v376, %v377
    %v379 = vadd.f32 %v327, %v328
    %v380 = vadd.f32 %v379, %v329
    %v381 = vadd.f32 %v380, %v330
    %v382 = vrot.slane %v381, 4
    %v383 = vadd.f32 %v381, %v382
    %v384 = vrot.slane %v383, 2
    %v385 = vadd.f32 %v383, %v384
    %v386 = vrot.slane %v385, 1
    %v387 = vadd.f32 %v385, %v386
    %v388 = vadd.f32 %v331, %v332
    %v389 = vadd.f32 %v388, %v333
    %v390 = vadd.f32 %v389, %v334
    %v391 = vrot.slane %v390, 4
    %v392 = vadd.f32 %v390, %v391
    %v393 = vrot.slane %v392, 2
    %v394 = vadd.f32 %v392, %v393
    %v395 = vrot.slane %v394, 1
    %v396 = vadd.f32 %v394, %v395
    %v397 = vadd.f32 %v335, %v336
    %v398 = vadd.f32 %v397, %v337
    %v399 = vadd.f32 %v398, %v338
    %v400 = vrot.slane %v399, 4
    %v401 = vadd.f32 %v399, %v400
    %v402 = vrot.slane %v401, 2
    %v403 = vadd.f32 %v401, %v402
    %v404 = vrot.slane %v403, 1
    %v405 = vadd.f32 %v403, %v404
    %v406 = vadd.f32 %v339, %v340
    %v407 = vadd.f32 %v406, %v341
    %v408 = vadd.f32 %v407, %v342
    %v409 = vrot.slane %v408, 4
    %v410 = vadd.f32 %v408, %v409
    %v411 = vrot.slane %v410, 2
    %v412 = vadd.f32 %v410, %v411
    %v413 = vrot.slane %v412, 1
    %v414 = vadd.f32 %v412, %v413
    %v415 = vld [vmem:[#allocation7] sm:$0xff]
    %v416 = vld [vmem:[%s3] sm:$0x1]
    %v418 = vperm.slane %v416, 0
    %v420 = vmul.f32 %v415, %v418
    %vm429 = vcmask 1041409
    %v430 = vsel %vm429, %v360, %v351
    %vm431 = vcmask 1042434
    %v432 = vsel %vm431, %v369, %v430
    %vm433 = vcmask 1043459
    %v434 = vsel %vm433, %v378, %v432
    %vm435 = vcmask 1044484
    %v436 = vsel %vm435, %v387, %v434
    %vm437 = vcmask 1045509
    %v438 = vsel %vm437, %v396, %v436
    %vm439 = vcmask 1046534
    %v440 = vsel %vm439, %v405, %v438
    %vm441 = vcmask 1047559
    %v442 = vsel %vm441, %v414, %v440
    %v444 = vadd.f32 %v420, %v442
    %v445 = vld [vmem:[#allocation8] sm:$0xff]
    %v446 = vmul.f32 %v444, %v445
    %447 = vst [vmem:[#allocation10] sm:$0xff] %v446
    // Predicated region
    $region38: #{tpu_custom_call.1} parent=1 // pred_check
      _
    $region39: #{tpu_custom_call.1} parent=1 // pred_check_branch
      %449 = sbr.rel (0) target = $region41
    $region40: #{tpu_custom_call.1} parent=1 // pred_region
      %451 = vsyncadd [#allocation4], 0
      %s453 = sshll.u32 [#allocation10], 4
      %s454 = int_to_ptr.vmem [resolvable:$true] %s453
      %s455 = sshll.u32 %s5, 4
      %s456 = int_to_ptr.hbm [resolvable:$true] %s455
      %458 = dma.vmem_to_hbm [thread:$0]  %s454, 128, %s456, [#allocation4]
    $region41: #{tpu_custom_call.1} parent=1 // pred_fallthru
      _
    // Predicated region
    $region42: #{tpu_custom_call.1} parent=1 // pred_check
      _
    $region43: #{tpu_custom_call.1} parent=1 // pred_check_branch
      %460 = sbr.rel (0) target = $region45
    $region44: #{tpu_custom_call.1} parent=1 // pred_region
      %462 = dma.done [#allocation4], 128
    $region45: #{tpu_custom_call.1} parent=1 // pred_fallthru
      _
    %463 = vsyncpa [#allocation3], 1
    %464 = vsyncpa [#allocation6], 1
    %465 = vsyncpa [#allocation9], 1
    %466 = vsyncpa [#allocation4], 1

</llo_original>
